<compile_context>
chip_gen: v5e
topology: v5e:2x2
jax: 0.10.0
libtpu: 0.0.40
codegen_flags: <defaults>
</compile_context>

<pallas_src>
import functools

import numpy as np
import jax
import jax.numpy as jnp
from jax.experimental import pallas as pl
from jax.experimental.pallas import tpu as pltpu

try:  # host-side assignment backend
    from scipy.optimize import linear_sum_assignment as _scipy_lsa
except Exception:  # pragma: no cover - scipy not installed
    _scipy_lsa = None


# ----------------------------- Pallas kernel ---------------------------------
def _fast_recip(x):
    """EUP approx reciprocal + one Newton step (VPU) -> ~f32 accuracy, no VALU divide."""
    r = pl.reciprocal(x, approx=True)
    return r * (2.0 - x * r)


def _cost_kernel(logits_ref, pboxes_ref, tids_ref, tboxes_ref, c_ref, *,
                 num_classes, w_class, w_bbox, w_giou, w_rad,
                 alpha=0.25, gamma=2.0):
    # logits_ref : (1, NC, Qt)  pred logits, queries on lanes
    # pboxes_ref : (1, 7, Qt)   pred boxes (cx, cy, cz, l, w, h, rad), queries on lanes
    # tids_ref   : (1, T, 1)    target class ids (as f32)
    # tboxes_ref : (1, T, 7)    target boxes
    # c_ref      : (1, T, Qt)   output transposed cost-matrix tile
    logits = logits_ref[0].astype(jnp.float32)                    # (NC, Qt)
    # nan_to_num once per tensor (reference applies it to the derived corners; for finite
    # inputs — the only non-pathological case — the result is identical).
    pboxes = jnp.nan_to_num(pboxes_ref[0].astype(jnp.float32))    # (7, Qt)
    tids = tids_ref[0].astype(jnp.float32)                        # (T, 1)
    tboxes = jnp.nan_to_num(tboxes_ref[0].astype(jnp.float32))    # (T, 7)

    T = tboxes.shape[0]

    # --- focal classification cost per (class, query): 2 EUP ops per element ---------------
    prob = jax.nn.sigmoid(logits)
    one_m_prob = 1.0 - prob
    log_1mp = jnp.log(one_m_prob + 1e-8)          # matches reference's epsilon on the neg term
    log_p = logits + log_1mp                      # exact identity log(p) = logits + log(1-p)
    if float(gamma) == 2.0:                       # fast path (original uses gamma == 2.0)
        pg = prob * prob
        qg = one_m_prob * one_m_prob
    else:
        pg = prob ** gamma
        qg = one_m_prob ** gamma
    neg_cost = (1.0 - alpha) * pg * (-log_1mp)
    pos_cost = alpha * qg * (-log_p)
    cls_cost = pos_cost - neg_cost                # (NC, Qt)

    # --- gather over target class ids -------------------------------------------------------
    if num_classes >= 32:
        # large class count: one-hot matmul rides the otherwise-idle MXU (f32 one-hot; v7x
        # MXU has no int path).
        class_iota = jax.lax.broadcasted_iota(jnp.float32, (T, num_classes), 1)
        one_hot = (class_iota == tids).astype(jnp.float32)                   # (T, NC)
        cost_class = jnp.dot(one_hot, cls_cost, preferred_element_type=jnp.float32)
    else:
        # small class count: one vselect per class (no mul+add; v5e/v6e have no f32 FMA).
        # Ids outside [0, NC) keep a zero class cost (same as the previous masked accumulate).
        cost_class = jnp.where(tids == 0.0, cls_cost[0:1, :], 0.0)           # (T, Qt)
        for c in range(1, num_classes):
            cost_class = jnp.where(tids == float(c), cls_cost[c:c + 1, :], cost_class)

    # single weighted accumulator; each term folds in as soon as it is complete.
    acc = w_class * cost_class

    # --- hoist each box-parameter slice exactly once (shared by L1 and GIoU) ---------------
    # TODO(synk): per-target (T,1) lane-column slices could be precomputed/transposed in the
    # wrapper, but with tiny T the broadcast cost is negligible; kept in-kernel for clarity.
    pb = [pboxes[d:d + 1, :] for d in range(7)]   # each (1, Qt)
    tb = [tboxes[:, d:d + 1] for d in range(7)]   # each (T, 1)

    # L1 cdist over the 6 box params, and over the radian channel
    cost_bbox = jnp.abs(tb[0] - pb[0])
    for d in range(1, 6):
        cost_bbox = cost_bbox + jnp.abs(tb[d] - pb[d])
    acc = acc + w_bbox * cost_bbox
    acc = acc + w_rad * jnp.abs(tb[6] - pb[6])

    # axis-aligned generalized 3D IoU (box_cxcyczlwh_to_xyxyxy + generalized_box3d_iou)
    vol1 = None   # (1, Qt)
    vol2 = None   # (T, 1)
    inter = None  # (T, Qt)
    enclose = None
    for d in range(3):
        mn1 = pb[d] - 0.5 * pb[d + 3]
        mx1 = pb[d] + 0.5 * pb[d + 3]
        mn2 = tb[d] - 0.5 * tb[d + 3]
        mx2 = tb[d] + 0.5 * tb[d + 3]
        side1 = mx1 - mn1
        side2 = mx2 - mn2
        vol1 = side1 if vol1 is None else vol1 * side1
        vol2 = side2 if vol2 is None else vol2 * side2
        inter_d = jnp.maximum(jnp.minimum(mx1, mx2) - jnp.maximum(mn1, mn2), 0.0)  # (T, Qt)
        encl_d = jnp.maximum(jnp.maximum(mx1, mx2) - jnp.minimum(mn1, mn2), 0.0)   # (T, Qt)
        inter = inter_d if inter is None else inter * inter_d
        enclose = encl_d if enclose is None else enclose * encl_d
    union = vol2 + vol1 - inter
    iou = inter * _fast_recip(union)
    giou = iou - (enclose - union) * _fast_recip(enclose)
    acc = acc + w_giou * (-giou)

    c_ref[0] = acc


def compute_cost_matrices(pred_logits_t, pred_boxes_t, tgt_ids_f, tgt_boxes,
                          cost_class=1.0, cost_bbox=1.0, cost_giou=1.0, cost_rad=1.0):
    """Returns the transposed cost matrices, shape (B, T, Qp).  Qp must be a multiple of 128."""
    B, NC, Q = pred_logits_t.shape
    T = tgt_boxes.shape[1]

    # Query-tile size: largest of {1024, 512, 256, 128} dividing Q (wrapper guarantees Q%128==0).
    q_tile = Q
    for cand in (1024, 512, 256, 128):
        if Q >= cand and Q % cand == 0:
            q_tile = cand
            break
    nq = Q // q_tile

    kernel = functools.partial(_cost_kernel, num_classes=int(NC),
                               w_class=float(cost_class), w_bbox=float(cost_bbox),
                               w_giou=float(cost_giou), w_rad=float(cost_rad))
    return pl.pallas_call(
        kernel,
        out_shape=jax.ShapeDtypeStruct((B, T, Q), jnp.float32),
        grid_spec=pltpu.PrefetchScalarGridSpec(
            num_scalar_prefetch=0,
            grid=(B, nq),
            in_specs=[
                pl.BlockSpec((1, NC, q_tile), lambda b, q: (b, 0, q)),
                pl.BlockSpec((1, 7, q_tile), lambda b, q: (b, 0, q)),
                pl.BlockSpec((1, T, 1), lambda b, q: (b, 0, 0)),
                pl.BlockSpec((1, T, 7), lambda b, q: (b, 0, 0)),
            ],
            out_specs=pl.BlockSpec((1, T, q_tile), lambda b, q: (b, 0, q)),
        ),
        # Batch and query tiles are independent: both parallel so v7x's two TensorCores split
        # the work even when B == 1; near no-op on single-TC v5e/v6e.
        compiler_params=pltpu.CompilerParams(
            dimension_semantics=("parallel", "parallel")),
    )(pred_logits_t, pred_boxes_t, tgt_ids_f, tgt_boxes)


# ----------------------- host-side Hungarian assignment ----------------------
# TODO(synk): linear_sum_assignment is a sequential, data-dependent host op in the original
# module (C_i.cpu()); no Pallas equivalent — scipy on host, NumPy JV fallback below.
def _linear_sum_assignment_np(cost):
    cost = np.asarray(cost, dtype=np.float64)
    transposed = cost.shape[0] > cost.shape[1]
    if transposed:
        cost = cost.T
    n, m = cost.shape
    INF = float("inf")
    u = np.zeros(n + 1)
    v = np.zeros(m + 1)
    p = np.zeros(m + 1, dtype=np.int64)
    way = np.zeros(m + 1, dtype=np.int64)
    for i in range(1, n + 1):
        p[0] = i
        j0 = 0
        minv = np.full(m + 1, INF)
        used = np.zeros(m + 1, dtype=bool)
        while True:
            used[j0] = True
            i0 = p[j0]
            delta = INF
            j1 = 0
            for j in range(1, m + 1):
                if not used[j]:
                    cur = cost[i0 - 1, j - 1] - u[i0] - v[j]
                    if cur < minv[j]:
                        minv[j] = cur
                        way[j] = j0
                    if minv[j] < delta:
                        delta = minv[j]
                        j1 = j
            for j in range(m + 1):
                if used[j]:
                    u[p[j]] += delta
                    v[j] -= delta
                else:
                    minv[j] -= delta
            j0 = j1
            if p[j0] == 0:
                break
        while True:
            j1 = way[j0]
            p[j0] = p[j1]
            j0 = j1
            if j0 == 0:
                break
    rows, cols = [], []
    for j in range(1, m + 1):
        if p[j] != 0:
            rows.append(p[j] - 1)
            cols.append(j - 1)
    rows = np.asarray(rows, dtype=np.int64)
    cols = np.asarray(cols, dtype=np.int64)
    if transposed:
        rows, cols = cols, rows
    order = np.argsort(rows)
    return rows[order], cols[order]


def linear_sum_assignment(cost):
    if _scipy_lsa is not None:
        r, c = _scipy_lsa(np.asarray(cost))
        return np.asarray(r, dtype=np.int64), np.asarray(c, dtype=np.int64)
    return _linear_sum_assignment_np(cost)


# ----------------------------- module wrapper ---------------------------------
class HungarianMatcher3d:
    def __init__(self, cost_class=1.0, cost_bbox=1.0, cost_giou=1.0, cost_rad=1.0):
        assert cost_class != 0 or cost_bbox != 0 or cost_giou != 0 or cost_rad != 0
        self.cost_class = cost_class
        self.cost_bbox = cost_bbox
        self.cost_giou = cost_giou
        self.cost_rad = cost_rad

    def __call__(self, outputs, targets):
        pred_logits = outputs["pred_logits"]
        pred_boxes = outputs["pred_boxes"]
        if "topk_indexes" in outputs:
            idx = outputs["topk_indexes"]                                   # (B, K, 1)
            pred_logits = jnp.take_along_axis(pred_logits, idx, axis=1)
            pred_boxes = jnp.take_along_axis(pred_boxes, idx, axis=1)

        pred_logits = pred_logits.astype(jnp.float32)
        pred_boxes = pred_boxes.astype(jnp.float32)
        B, Q, NC = pred_logits.shape
        tgt_ids = jnp.stack([t["labels"] for t in targets])                 # (B, T)
        tgt_boxes = jnp.stack([t["gt_boxes"] for t in targets])             # (B, T, 7)

        # Pad the query axis to a multiple of 128 so output stores stay unmasked lane-dense.
        # Padded columns get harmless finite values and are sliced off before assignment.
        Qp = ((Q + 127) // 128) * 128
        if Qp != Q:
            pad = Qp - Q
            pred_logits = jnp.pad(pred_logits, ((0, 0), (0, pad), (0, 0)),
                                  constant_values=-20.0)
            dummy = jnp.concatenate([jnp.zeros((B, pad, 3), jnp.float32),
                                     jnp.ones((B, pad, 3), jnp.float32),
                                     jnp.zeros((B, pad, 1), jnp.float32)], axis=-1)
            pred_boxes = jnp.concatenate([pred_boxes, dummy], axis=1)

        # Lane-dense layout: queries on the last (lane) axis.
        pred_logits_t = jnp.transpose(pred_logits, (0, 2, 1))               # (B, NC, Qp)
        pred_boxes_t = jnp.transpose(pred_boxes, (0, 2, 1))                 # (B, 7, Qp)
        tgt_ids_f = tgt_ids.astype(jnp.float32)[..., None]                  # (B, T, 1)
        tgt_boxes_f = tgt_boxes.astype(jnp.float32)                         # (B, T, 7)

        C_tq = compute_cost_matrices(pred_logits_t, pred_boxes_t, tgt_ids_f, tgt_boxes_f,
                                     self.cost_class, self.cost_bbox,
                                     self.cost_giou, self.cost_rad)          # (B, T, Qp)
        C_tq = jax.block_until_ready(C_tq)
        C_np = np.asarray(C_tq)[:, :, :Q]                                    # drop padded queries

        indices = []
        for b in range(B):
            # cost matrix is transposed (targets x queries): swap (i, j) back.
            t_idx, q_idx = linear_sum_assignment(C_np[b])
            order = np.argsort(q_idx)
            indices.append((q_idx[order].astype(np.int64), t_idx[order].astype(np.int64)))
        return indices, jnp.asarray(C_np)


# ----------------------------- reference (NumPy) ------------------------------
def _reference_cost(pred_logits, pred_boxes, tgt_ids, tgt_boxes,
                    w_class=1.0, w_bbox=1.0, w_giou=1.0, w_rad=1.0,
                    alpha=0.25, gamma=2.0):
    pred_logits = np.asarray(pred_logits, np.float32)
    pred_boxes = np.asarray(pred_boxes, np.float32)
    tgt_ids = np.asarray(tgt_ids)
    tgt_boxes = np.asarray(tgt_boxes, np.float32)
    B, Q, _ = pred_logits.shape
    T = tgt_boxes.shape[1]
    out = np.zeros((B, Q, T), np.float32)
    for b in range(B):
        prob = 1.0 / (1.0 + np.exp(-pred_logits[b]))
        neg = (1 - alpha) * prob ** gamma * -np.log(1 - prob + 1e-8)
        pos = alpha * (1 - prob) ** gamma * -np.log(prob + 1e-8)
        cost_class = (pos - neg)[:, tgt_ids[b]]
        ob, tb = pred_boxes[b, :, :6], tgt_boxes[b, :, :6]
        orad, trad = pred_boxes[b, :, 6:7], tgt_boxes[b, :, 6:7]
        cost_bbox = np.abs(ob[:, None, :] - tb[None, :, :]).sum(-1)
        cost_rad = np.abs(orad[:, None, :] - trad[None, :, :]).sum(-1)

        def corners(x):
            c, s = x[:, :3], x[:, 3:6]
            return np.nan_to_num(np.concatenate([c - 0.5 * s, c + 0.5 * s], -1))

        b1, b2 = corners(ob), corners(tb)
        vol1 = np.prod(b1[:, 3:] - b1[:, :3], -1)
        vol2 = np.prod(b2[:, 3:] - b2[:, :3], -1)
        lt = np.maximum(b1[:, None, :3], b2[None, :, :3])
        rb = np.minimum(b1[:, None, 3:], b2[None, :, 3:])
        inter = np.prod(np.clip(rb - lt, 0, None), -1)
        union = vol1[:, None] + vol2[None, :] - inter
        iou = inter / union
        lt2 = np.minimum(b1[:, None, :3], b2[None, :, :3])
        rb2 = np.maximum(b1[:, None, 3:], b2[None, :, 3:])
        vol = np.prod(np.clip(rb2 - lt2, 0, None), -1)
        giou = iou - (vol - union) / vol
        out[b] = (w_bbox * cost_bbox + w_class * cost_class
                  - w_giou * giou + w_rad * cost_rad)
    return out


# --------------------------------- main ---------------------------------------
if __name__ == "__main__":
    key = jax.random.PRNGKey(0)
    ks = jax.random.split(key, 8)
    B, Q, T, NC = 2, 128, 16, 8   # Q multiple of 128 -> lane-dense output stores

    pred_logits = jax.random.normal(ks[0], (B, Q, NC), jnp.float32)
    p_centers = jax.random.uniform(ks[1], (B, Q, 3), minval=-10.0, maxval=10.0)
    p_sizes = jax.random.uniform(ks[2], (B, Q, 3), minval=0.5, maxval=3.0)
    p_rads = jax.random.uniform(ks[3], (B, Q, 1), minval=-3.14, maxval=3.14)
    pred_boxes = jnp.concatenate([p_centers, p_sizes, p_rads], axis=-1)      # (B, Q, 7)

    tgt_ids = jax.random.randint(ks[4], (B, T), 0, NC)
    t_centers = jax.random.uniform(ks[5], (B, T, 3), minval=-10.0, maxval=10.0)
    t_sizes = jax.random.uniform(ks[6], (B, T, 3), minval=0.5, maxval=3.0)
    t_rads = jax.random.uniform(ks[7], (B, T, 1), minval=-3.14, maxval=3.14)
    tgt_boxes = jnp.concatenate([t_centers, t_sizes, t_rads], axis=-1)       # (B, T, 7)

    outputs = {"pred_logits": pred_logits, "pred_boxes": pred_boxes}
    targets = [{"labels": tgt_ids[b], "gt_boxes": tgt_boxes[b]} for b in range(B)]

    matcher = HungarianMatcher3d(cost_class=1.0, cost_bbox=1.0, cost_giou=1.0, cost_rad=1.0)
    indices, C_tq = matcher(outputs, targets)
    C_tq = jax.block_until_ready(C_tq)

    # kernel output is (B, T, Q); reference is (B, Q, T)
    C_qt = np.transpose(np.asarray(C_tq), (0, 2, 1))
    C_ref = _reference_cost(pred_logits, pred_boxes, tgt_ids, tgt_boxes)
    # tolerance covers the EUP approx-reciprocal (+Newton refine) and the log identity
    assert np.allclose(C_qt, C_ref, rtol=2e-3, atol=2e-3), (
        "max abs diff %g" % float(np.max(np.abs(C_qt - C_ref))))
    assert len(indices) == B and all(len(i) == T and len(j) == T for i, j in indices)
    for i, j in indices:
        assert np.all(i >= 0) and np.all(i < Q) and np.all(j >= 0) and np.all(j < T)
        assert len(np.unique(i)) == T and len(np.unique(j)) == T

    print("KERNEL_OK")
</pallas_src>

<mosaic_0001>
module attributes {stable_mosaic.version = 11 : i64} {
  func.func @_cost_kernel(%arg0: i32, %arg1: i32, %arg2: memref<1x8x128xf32, #tpu.memory_space<vmem>>, %arg3: memref<1x7x128xf32, #tpu.memory_space<vmem>>, %arg4: memref<1x16x1xf32, #tpu.memory_space<vmem>>, %arg5: memref<1x16x7xf32, #tpu.memory_space<vmem>>, %arg6: memref<1x16x128xf32, #tpu.memory_space<vmem>>) attributes {dimension_semantics = [#tpu.dimension_semantics<parallel>, #tpu.dimension_semantics<parallel>], iteration_bounds = array<i64: 2, 1>, scalar_prefetch = 0 : i64, scratch_operands = 0 : i64, tpu.core_type = #tpu.core_type<tc>, window_params = [{transform_indices = @transform_0, window_bounds = array<i64: 1, 8, 128>}, {transform_indices = @transform_1, window_bounds = array<i64: 1, 7, 128>}, {transform_indices = @transform_2, window_bounds = array<i64: 1, 16, 1>}, {transform_indices = @transform_3, window_bounds = array<i64: 1, 16, 7>}, {transform_indices = @transform_4, window_bounds = array<i64: 1, 16, 128>}]} {
    %c0 = arith.constant 0 : index
    %c0_0 = arith.constant 0 : index
    %c0_1 = arith.constant 0 : index
    %0 = vector.load %arg2[%c0, %c0_0, %c0_1] : memref<1x8x128xf32, #tpu.memory_space<vmem>>, vector<1x8x128xf32>
    %1 = vector.shape_cast %0 : vector<1x8x128xf32> to vector<8x128xf32>
    %c0_2 = arith.constant 0 : index
    %c0_3 = arith.constant 0 : index
    %c0_4 = arith.constant 0 : index
    %2 = vector.load %arg3[%c0_2, %c0_3, %c0_4] : memref<1x7x128xf32, #tpu.memory_space<vmem>>, vector<1x7x128xf32>
    %3 = vector.shape_cast %2 : vector<1x7x128xf32> to vector<7x128xf32>
    %4 = arith.cmpf one, %3, %3 : vector<7x128xf32>
    %cst = arith.constant 0.000000e+00 : f32
    %5 = vector.broadcast %cst : f32 to vector<7x128xf32>
    %6 = arith.select %4, %5, %3 : vector<7x128xi1>, vector<7x128xf32>
    %cst_5 = arith.constant 0x7F800000 : f32
    %7 = vector.broadcast %cst_5 : f32 to vector<7x128xf32>
    %8 = arith.cmpf oeq, %6, %7 : vector<7x128xf32>
    %cst_6 = arith.constant 3.40282347E+38 : f32
    %9 = vector.broadcast %cst_6 : f32 to vector<7x128xf32>
    %10 = arith.select %8, %9, %6 : vector<7x128xi1>, vector<7x128xf32>
    %cst_7 = arith.constant 0xFF800000 : f32
    %11 = vector.broadcast %cst_7 : f32 to vector<7x128xf32>
    %12 = arith.cmpf oeq, %10, %11 : vector<7x128xf32>
    %cst_8 = arith.constant -3.40282347E+38 : f32
    %13 = vector.broadcast %cst_8 : f32 to vector<7x128xf32>
    %14 = arith.select %12, %13, %10 : vector<7x128xi1>, vector<7x128xf32>
    %c0_9 = arith.constant 0 : index
    %c0_10 = arith.constant 0 : index
    %c0_11 = arith.constant 0 : index
    %15 = vector.load %arg4[%c0_9, %c0_10, %c0_11] : memref<1x16x1xf32, #tpu.memory_space<vmem>>, vector<1x16x1xf32>
    %16 = vector.shape_cast %15 : vector<1x16x1xf32> to vector<16x1xf32>
    %c0_12 = arith.constant 0 : index
    %c0_13 = arith.constant 0 : index
    %c0_14 = arith.constant 0 : index
    %17 = vector.load %arg5[%c0_12, %c0_13, %c0_14] : memref<1x16x7xf32, #tpu.memory_space<vmem>>, vector<1x16x7xf32>
    %18 = vector.shape_cast %17 : vector<1x16x7xf32> to vector<16x7xf32>
    %19 = arith.cmpf one, %18, %18 : vector<16x7xf32>
    %cst_15 = arith.constant 0.000000e+00 : f32
    %20 = vector.broadcast %cst_15 : f32 to vector<16x7xf32>
    %21 = arith.select %19, %20, %18 : vector<16x7xi1>, vector<16x7xf32>
    %cst_16 = arith.constant 0x7F800000 : f32
    %22 = vector.broadcast %cst_16 : f32 to vector<16x7xf32>
    %23 = arith.cmpf oeq, %21, %22 : vector<16x7xf32>
    %cst_17 = arith.constant 3.40282347E+38 : f32
    %24 = vector.broadcast %cst_17 : f32 to vector<16x7xf32>
    %25 = arith.select %23, %24, %21 : vector<16x7xi1>, vector<16x7xf32>
    %cst_18 = arith.constant 0xFF800000 : f32
    %26 = vector.broadcast %cst_18 : f32 to vector<16x7xf32>
    %27 = arith.cmpf oeq, %25, %26 : vector<16x7xf32>
    %cst_19 = arith.constant -3.40282347E+38 : f32
    %28 = vector.broadcast %cst_19 : f32 to vector<16x7xf32>
    %29 = arith.select %27, %28, %25 : vector<16x7xi1>, vector<16x7xf32>
    %30 = arith.negf %1 : vector<8x128xf32>
    %31 = math.exp %30 : vector<8x128xf32>
    %cst_20 = arith.constant 1.000000e+00 : f32
    %32 = vector.broadcast %cst_20 : f32 to vector<8x128xf32>
    %33 = arith.addf %32, %31 : vector<8x128xf32>
    %34 = arith.divf %32, %33 : vector<8x128xf32>
    %cst_21 = arith.constant 1.000000e+00 : f32
    %35 = vector.broadcast %cst_21 : f32 to vector<8x128xf32>
    %36 = arith.subf %35, %34 : vector<8x128xf32>
    %cst_22 = arith.constant 9.99999993E-9 : f32
    %37 = vector.broadcast %cst_22 : f32 to vector<8x128xf32>
    %38 = arith.addf %36, %37 : vector<8x128xf32>
    %39 = math.log %38 : vector<8x128xf32>
    %40 = arith.addf %1, %39 : vector<8x128xf32>
    %41 = arith.mulf %34, %34 : vector<8x128xf32>
    %42 = arith.mulf %36, %36 : vector<8x128xf32>
    %cst_23 = arith.constant 7.500000e-01 : f32
    %43 = vector.broadcast %cst_23 : f32 to vector<8x128xf32>
    %44 = arith.mulf %43, %41 : vector<8x128xf32>
    %cst_24 = arith.constant 0.000000e+00 : f32
    %45 = vector.broadcast %cst_24 : f32 to vector<8x128xf32>
    %46 = arith.subf %45, %39 : vector<8x128xf32>
    %47 = arith.mulf %44, %46 : vector<8x128xf32>
    %cst_25 = arith.constant 2.500000e-01 : f32
    %48 = vector.broadcast %cst_25 : f32 to vector<8x128xf32>
    %49 = arith.mulf %48, %42 : vector<8x128xf32>
    %cst_26 = arith.constant 0.000000e+00 : f32
    %50 = vector.broadcast %cst_26 : f32 to vector<8x128xf32>
    %51 = arith.subf %50, %40 : vector<8x128xf32>
    %52 = arith.mulf %49, %51 : vector<8x128xf32>
    %53 = arith.subf %52, %47 : vector<8x128xf32>
    %cst_27 = arith.constant 0.000000e+00 : f32
    %54 = vector.broadcast %cst_27 : f32 to vector<16x1xf32>
    %55 = arith.cmpf oeq, %16, %54 : vector<16x1xf32>
    %56 = vector.extract_strided_slice %53 {offsets = [0, 0], sizes = [1, 128], strides = [1, 1]} : vector<8x128xf32> to vector<1x128xf32>
    %cst_28 = arith.constant 0.000000e+00 : f32
    %57 = vector.shape_cast %55 : vector<16x1xi1> to vector<16x1xi1>
    %58 = vector.broadcast %57 : vector<16x1xi1> to vector<16x128xi1>
    %59 = vector.shape_cast %56 : vector<1x128xf32> to vector<1x128xf32>
    %60 = vector.broadcast %59 : vector<1x128xf32> to vector<16x128xf32>
    %61 = vector.broadcast %cst_28 : f32 to vector<16x128xf32>
    %62 = arith.select %58, %60, %61 : vector<16x128xi1>, vector<16x128xf32>
    %cst_29 = arith.constant 1.000000e+00 : f32
    %63 = vector.broadcast %cst_29 : f32 to vector<16x1xf32>
    %64 = arith.cmpf oeq, %16, %63 : vector<16x1xf32>
    %65 = vector.extract_strided_slice %53 {offsets = [1, 0], sizes = [1, 128], strides = [1, 1]} : vector<8x128xf32> to vector<1x128xf32>
    %66 = vector.shape_cast %64 : vector<16x1xi1> to vector<16x1xi1>
    %67 = vector.broadcast %66 : vector<16x1xi1> to vector<16x128xi1>
    %68 = vector.shape_cast %65 : vector<1x128xf32> to vector<1x128xf32>
    %69 = vector.broadcast %68 : vector<1x128xf32> to vector<16x128xf32>
    %70 = arith.select %67, %69, %62 : vector<16x128xi1>, vector<16x128xf32>
    %cst_30 = arith.constant 2.000000e+00 : f32
    %71 = vector.broadcast %cst_30 : f32 to vector<16x1xf32>
    %72 = arith.cmpf oeq, %16, %71 : vector<16x1xf32>
    %73 = vector.extract_strided_slice %53 {offsets = [2, 0], sizes = [1, 128], strides = [1, 1]} : vector<8x128xf32> to vector<1x128xf32>
    %74 = vector.shape_cast %72 : vector<16x1xi1> to vector<16x1xi1>
    %75 = vector.broadcast %74 : vector<16x1xi1> to vector<16x128xi1>
    %76 = vector.shape_cast %73 : vector<1x128xf32> to vector<1x128xf32>
    %77 = vector.broadcast %76 : vector<1x128xf32> to vector<16x128xf32>
    %78 = arith.select %75, %77, %70 : vector<16x128xi1>, vector<16x128xf32>
    %cst_31 = arith.constant 3.000000e+00 : f32
    %79 = vector.broadcast %cst_31 : f32 to vector<16x1xf32>
    %80 = arith.cmpf oeq, %16, %79 : vector<16x1xf32>
    %81 = vector.extract_strided_slice %53 {offsets = [3, 0], sizes = [1, 128], strides = [1, 1]} : vector<8x128xf32> to vector<1x128xf32>
    %82 = vector.shape_cast %80 : vector<16x1xi1> to vector<16x1xi1>
    %83 = vector.broadcast %82 : vector<16x1xi1> to vector<16x128xi1>
    %84 = vector.shape_cast %81 : vector<1x128xf32> to vector<1x128xf32>
    %85 = vector.broadcast %84 : vector<1x128xf32> to vector<16x128xf32>
    %86 = arith.select %83, %85, %78 : vector<16x128xi1>, vector<16x128xf32>
    %cst_32 = arith.constant 4.000000e+00 : f32
    %87 = vector.broadcast %cst_32 : f32 to vector<16x1xf32>
    %88 = arith.cmpf oeq, %16, %87 : vector<16x1xf32>
    %89 = vector.extract_strided_slice %53 {offsets = [4, 0], sizes = [1, 128], strides = [1, 1]} : vector<8x128xf32> to vector<1x128xf32>
    %90 = vector.shape_cast %88 : vector<16x1xi1> to vector<16x1xi1>
    %91 = vector.broadcast %90 : vector<16x1xi1> to vector<16x128xi1>
    %92 = vector.shape_cast %89 : vector<1x128xf32> to vector<1x128xf32>
    %93 = vector.broadcast %92 : vector<1x128xf32> to vector<16x128xf32>
    %94 = arith.select %91, %93, %86 : vector<16x128xi1>, vector<16x128xf32>
    %cst_33 = arith.constant 5.000000e+00 : f32
    %95 = vector.broadcast %cst_33 : f32 to vector<16x1xf32>
    %96 = arith.cmpf oeq, %16, %95 : vector<16x1xf32>
    %97 = vector.extract_strided_slice %53 {offsets = [5, 0], sizes = [1, 128], strides = [1, 1]} : vector<8x128xf32> to vector<1x128xf32>
    %98 = vector.shape_cast %96 : vector<16x1xi1> to vector<16x1xi1>
    %99 = vector.broadcast %98 : vector<16x1xi1> to vector<16x128xi1>
    %100 = vector.shape_cast %97 : vector<1x128xf32> to vector<1x128xf32>
    %101 = vector.broadcast %100 : vector<1x128xf32> to vector<16x128xf32>
    %102 = arith.select %99, %101, %94 : vector<16x128xi1>, vector<16x128xf32>
    %cst_34 = arith.constant 6.000000e+00 : f32
    %103 = vector.broadcast %cst_34 : f32 to vector<16x1xf32>
    %104 = arith.cmpf oeq, %16, %103 : vector<16x1xf32>
    %105 = vector.extract_strided_slice %53 {offsets = [6, 0], sizes = [1, 128], strides = [1, 1]} : vector<8x128xf32> to vector<1x128xf32>
    %106 = vector.shape_cast %104 : vector<16x1xi1> to vector<16x1xi1>
    %107 = vector.broadcast %106 : vector<16x1xi1> to vector<16x128xi1>
    %108 = vector.shape_cast %105 : vector<1x128xf32> to vector<1x128xf32>
    %109 = vector.broadcast %108 : vector<1x128xf32> to vector<16x128xf32>
    %110 = arith.select %107, %109, %102 : vector<16x128xi1>, vector<16x128xf32>
    %cst_35 = arith.constant 7.000000e+00 : f32
    %111 = vector.broadcast %cst_35 : f32 to vector<16x1xf32>
    %112 = arith.cmpf oeq, %16, %111 : vector<16x1xf32>
    %113 = vector.extract_strided_slice %53 {offsets = [7, 0], sizes = [1, 128], strides = [1, 1]} : vector<8x128xf32> to vector<1x128xf32>
    %114 = vector.shape_cast %112 : vector<16x1xi1> to vector<16x1xi1>
    %115 = vector.broadcast %114 : vector<16x1xi1> to vector<16x128xi1>
    %116 = vector.shape_cast %113 : vector<1x128xf32> to vector<1x128xf32>
    %117 = vector.broadcast %116 : vector<1x128xf32> to vector<16x128xf32>
    %118 = arith.select %115, %117, %110 : vector<16x128xi1>, vector<16x128xf32>
    %cst_36 = arith.constant 1.000000e+00 : f32
    %119 = vector.broadcast %cst_36 : f32 to vector<16x128xf32>
    %120 = arith.mulf %119, %118 : vector<16x128xf32>
    %121 = vector.extract_strided_slice %14 {offsets = [0, 0], sizes = [1, 128], strides = [1, 1]} : vector<7x128xf32> to vector<1x128xf32>
    %122 = vector.extract_strided_slice %14 {offsets = [1, 0], sizes = [1, 128], strides = [1, 1]} : vector<7x128xf32> to vector<1x128xf32>
    %123 = vector.extract_strided_slice %14 {offsets = [2, 0], sizes = [1, 128], strides = [1, 1]} : vector<7x128xf32> to vector<1x128xf32>
    %124 = vector.extract_strided_slice %14 {offsets = [3, 0], sizes = [1, 128], strides = [1, 1]} : vector<7x128xf32> to vector<1x128xf32>
    %125 = vector.extract_strided_slice %14 {offsets = [4, 0], sizes = [1, 128], strides = [1, 1]} : vector<7x128xf32> to vector<1x128xf32>
    %126 = vector.extract_strided_slice %14 {offsets = [5, 0], sizes = [1, 128], strides = [1, 1]} : vector<7x128xf32> to vector<1x128xf32>
    %127 = vector.extract_strided_slice %14 {offsets = [6, 0], sizes = [1, 128], strides = [1, 1]} : vector<7x128xf32> to vector<1x128xf32>
    %128 = vector.extract_strided_slice %29 {offsets = [0, 0], sizes = [16, 1], strides = [1, 1]} : vector<16x7xf32> to vector<16x1xf32>
    %129 = vector.extract_strided_slice %29 {offsets = [0, 1], sizes = [16, 1], strides = [1, 1]} : vector<16x7xf32> to vector<16x1xf32>
    %130 = vector.extract_strided_slice %29 {offsets = [0, 2], sizes = [16, 1], strides = [1, 1]} : vector<16x7xf32> to vector<16x1xf32>
    %131 = vector.extract_strided_slice %29 {offsets = [0, 3], sizes = [16, 1], strides = [1, 1]} : vector<16x7xf32> to vector<16x1xf32>
    %132 = vector.extract_strided_slice %29 {offsets = [0, 4], sizes = [16, 1], strides = [1, 1]} : vector<16x7xf32> to vector<16x1xf32>
    %133 = vector.extract_strided_slice %29 {offsets = [0, 5], sizes = [16, 1], strides = [1, 1]} : vector<16x7xf32> to vector<16x1xf32>
    %134 = vector.extract_strided_slice %29 {offsets = [0, 6], sizes = [16, 1], strides = [1, 1]} : vector<16x7xf32> to vector<16x1xf32>
    %135 = vector.broadcast %128 : vector<16x1xf32> to vector<16x128xf32>
    %136 = vector.broadcast %121 : vector<1x128xf32> to vector<16x128xf32>
    %137 = arith.subf %135, %136 : vector<16x128xf32>
    %138 = math.absf %137 : vector<16x128xf32>
    %139 = vector.broadcast %129 : vector<16x1xf32> to vector<16x128xf32>
    %140 = vector.broadcast %122 : vector<1x128xf32> to vector<16x128xf32>
    %141 = arith.subf %139, %140 : vector<16x128xf32>
    %142 = math.absf %141 : vector<16x128xf32>
    %143 = arith.addf %138, %142 : vector<16x128xf32>
    %144 = vector.broadcast %130 : vector<16x1xf32> to vector<16x128xf32>
    %145 = vector.broadcast %123 : vector<1x128xf32> to vector<16x128xf32>
    %146 = arith.subf %144, %145 : vector<16x128xf32>
    %147 = math.absf %146 : vector<16x128xf32>
    %148 = arith.addf %143, %147 : vector<16x128xf32>
    %149 = vector.broadcast %131 : vector<16x1xf32> to vector<16x128xf32>
    %150 = vector.broadcast %124 : vector<1x128xf32> to vector<16x128xf32>
    %151 = arith.subf %149, %150 : vector<16x128xf32>
    %152 = math.absf %151 : vector<16x128xf32>
    %153 = arith.addf %148, %152 : vector<16x128xf32>
    %154 = vector.broadcast %132 : vector<16x1xf32> to vector<16x128xf32>
    %155 = vector.broadcast %125 : vector<1x128xf32> to vector<16x128xf32>
    %156 = arith.subf %154, %155 : vector<16x128xf32>
    %157 = math.absf %156 : vector<16x128xf32>
    %158 = arith.addf %153, %157 : vector<16x128xf32>
    %159 = vector.broadcast %133 : vector<16x1xf32> to vector<16x128xf32>
    %160 = vector.broadcast %126 : vector<1x128xf32> to vector<16x128xf32>
    %161 = arith.subf %159, %160 : vector<16x128xf32>
    %162 = math.absf %161 : vector<16x128xf32>
    %163 = arith.addf %158, %162 : vector<16x128xf32>
    %cst_37 = arith.constant 1.000000e+00 : f32
    %164 = vector.broadcast %cst_37 : f32 to vector<16x128xf32>
    %165 = arith.mulf %164, %163 : vector<16x128xf32>
    %166 = arith.addf %120, %165 : vector<16x128xf32>
    %167 = vector.broadcast %134 : vector<16x1xf32> to vector<16x128xf32>
    %168 = vector.broadcast %127 : vector<1x128xf32> to vector<16x128xf32>
    %169 = arith.subf %167, %168 : vector<16x128xf32>
    %170 = math.absf %169 : vector<16x128xf32>
    %cst_38 = arith.constant 1.000000e+00 : f32
    %171 = vector.broadcast %cst_38 : f32 to vector<16x128xf32>
    %172 = arith.mulf %171, %170 : vector<16x128xf32>
    %173 = arith.addf %166, %172 : vector<16x128xf32>
    %cst_39 = arith.constant 5.000000e-01 : f32
    %174 = vector.broadcast %cst_39 : f32 to vector<1x128xf32>
    %175 = arith.mulf %174, %124 : vector<1x128xf32>
    %176 = arith.subf %121, %175 : vector<1x128xf32>
    %cst_40 = arith.constant 5.000000e-01 : f32
    %177 = vector.broadcast %cst_40 : f32 to vector<1x128xf32>
    %178 = arith.mulf %177, %124 : vector<1x128xf32>
    %179 = arith.addf %121, %178 : vector<1x128xf32>
    %cst_41 = arith.constant 5.000000e-01 : f32
    %180 = vector.broadcast %cst_41 : f32 to vector<16x1xf32>
    %181 = arith.mulf %180, %131 : vector<16x1xf32>
    %182 = arith.subf %128, %181 : vector<16x1xf32>
    %cst_42 = arith.constant 5.000000e-01 : f32
    %183 = vector.broadcast %cst_42 : f32 to vector<16x1xf32>
    %184 = arith.mulf %183, %131 : vector<16x1xf32>
    %185 = arith.addf %128, %184 : vector<16x1xf32>
    %186 = arith.subf %179, %176 : vector<1x128xf32>
    %187 = arith.subf %185, %182 : vector<16x1xf32>
    %188 = vector.broadcast %179 : vector<1x128xf32> to vector<16x128xf32>
    %189 = vector.broadcast %185 : vector<16x1xf32> to vector<16x128xf32>
    %190 = arith.minimumf %188, %189 : vector<16x128xf32>
    %191 = vector.broadcast %176 : vector<1x128xf32> to vector<16x128xf32>
    %192 = vector.broadcast %182 : vector<16x1xf32> to vector<16x128xf32>
    %193 = arith.maximumf %191, %192 : vector<16x128xf32>
    %194 = arith.subf %190, %193 : vector<16x128xf32>
    %cst_43 = arith.constant 0.000000e+00 : f32
    %195 = vector.broadcast %cst_43 : f32 to vector<16x128xf32>
    %196 = arith.maximumf %194, %195 : vector<16x128xf32>
    %197 = vector.broadcast %179 : vector<1x128xf32> to vector<16x128xf32>
    %198 = vector.broadcast %185 : vector<16x1xf32> to vector<16x128xf32>
    %199 = arith.maximumf %197, %198 : vector<16x128xf32>
    %200 = vector.broadcast %176 : vector<1x128xf32> to vector<16x128xf32>
    %201 = vector.broadcast %182 : vector<16x1xf32> to vector<16x128xf32>
    %202 = arith.minimumf %200, %201 : vector<16x128xf32>
    %203 = arith.subf %199, %202 : vector<16x128xf32>
    %cst_44 = arith.constant 0.000000e+00 : f32
    %204 = vector.broadcast %cst_44 : f32 to vector<16x128xf32>
    %205 = arith.maximumf %203, %204 : vector<16x128xf32>
    %cst_45 = arith.constant 5.000000e-01 : f32
    %206 = vector.broadcast %cst_45 : f32 to vector<1x128xf32>
    %207 = arith.mulf %206, %125 : vector<1x128xf32>
    %208 = arith.subf %122, %207 : vector<1x128xf32>
    %cst_46 = arith.constant 5.000000e-01 : f32
    %209 = vector.broadcast %cst_46 : f32 to vector<1x128xf32>
    %210 = arith.mulf %209, %125 : vector<1x128xf32>
    %211 = arith.addf %122, %210 : vector<1x128xf32>
    %cst_47 = arith.constant 5.000000e-01 : f32
    %212 = vector.broadcast %cst_47 : f32 to vector<16x1xf32>
    %213 = arith.mulf %212, %132 : vector<16x1xf32>
    %214 = arith.subf %129, %213 : vector<16x1xf32>
    %cst_48 = arith.constant 5.000000e-01 : f32
    %215 = vector.broadcast %cst_48 : f32 to vector<16x1xf32>
    %216 = arith.mulf %215, %132 : vector<16x1xf32>
    %217 = arith.addf %129, %216 : vector<16x1xf32>
    %218 = arith.subf %211, %208 : vector<1x128xf32>
    %219 = arith.subf %217, %214 : vector<16x1xf32>
    %220 = arith.mulf %186, %218 : vector<1x128xf32>
    %221 = arith.mulf %187, %219 : vector<16x1xf32>
    %222 = vector.broadcast %211 : vector<1x128xf32> to vector<16x128xf32>
    %223 = vector.broadcast %217 : vector<16x1xf32> to vector<16x128xf32>
    %224 = arith.minimumf %222, %223 : vector<16x128xf32>
    %225 = vector.broadcast %208 : vector<1x128xf32> to vector<16x128xf32>
    %226 = vector.broadcast %214 : vector<16x1xf32> to vector<16x128xf32>
    %227 = arith.maximumf %225, %226 : vector<16x128xf32>
    %228 = arith.subf %224, %227 : vector<16x128xf32>
    %cst_49 = arith.constant 0.000000e+00 : f32
    %229 = vector.broadcast %cst_49 : f32 to vector<16x128xf32>
    %230 = arith.maximumf %228, %229 : vector<16x128xf32>
    %231 = vector.broadcast %211 : vector<1x128xf32> to vector<16x128xf32>
    %232 = vector.broadcast %217 : vector<16x1xf32> to vector<16x128xf32>
    %233 = arith.maximumf %231, %232 : vector<16x128xf32>
    %234 = vector.broadcast %208 : vector<1x128xf32> to vector<16x128xf32>
    %235 = vector.broadcast %214 : vector<16x1xf32> to vector<16x128xf32>
    %236 = arith.minimumf %234, %235 : vector<16x128xf32>
    %237 = arith.subf %233, %236 : vector<16x128xf32>
    %cst_50 = arith.constant 0.000000e+00 : f32
    %238 = vector.broadcast %cst_50 : f32 to vector<16x128xf32>
    %239 = arith.maximumf %237, %238 : vector<16x128xf32>
    %240 = arith.mulf %196, %230 : vector<16x128xf32>
    %241 = arith.mulf %205, %239 : vector<16x128xf32>
    %cst_51 = arith.constant 5.000000e-01 : f32
    %242 = vector.broadcast %cst_51 : f32 to vector<1x128xf32>
    %243 = arith.mulf %242, %126 : vector<1x128xf32>
    %244 = arith.subf %123, %243 : vector<1x128xf32>
    %cst_52 = arith.constant 5.000000e-01 : f32
    %245 = vector.broadcast %cst_52 : f32 to vector<1x128xf32>
    %246 = arith.mulf %245, %126 : vector<1x128xf32>
    %247 = arith.addf %123, %246 : vector<1x128xf32>
    %cst_53 = arith.constant 5.000000e-01 : f32
    %248 = vector.broadcast %cst_53 : f32 to vector<16x1xf32>
    %249 = arith.mulf %248, %133 : vector<16x1xf32>
    %250 = arith.subf %130, %249 : vector<16x1xf32>
    %cst_54 = arith.constant 5.000000e-01 : f32
    %251 = vector.broadcast %cst_54 : f32 to vector<16x1xf32>
    %252 = arith.mulf %251, %133 : vector<16x1xf32>
    %253 = arith.addf %130, %252 : vector<16x1xf32>
    %254 = arith.subf %247, %244 : vector<1x128xf32>
    %255 = arith.subf %253, %250 : vector<16x1xf32>
    %256 = arith.mulf %220, %254 : vector<1x128xf32>
    %257 = arith.mulf %221, %255 : vector<16x1xf32>
    %258 = vector.broadcast %247 : vector<1x128xf32> to vector<16x128xf32>
    %259 = vector.broadcast %253 : vector<16x1xf32> to vector<16x128xf32>
    %260 = arith.minimumf %258, %259 : vector<16x128xf32>
    %261 = vector.broadcast %244 : vector<1x128xf32> to vector<16x128xf32>
    %262 = vector.broadcast %250 : vector<16x1xf32> to vector<16x128xf32>
    %263 = arith.maximumf %261, %262 : vector<16x128xf32>
    %264 = arith.subf %260, %263 : vector<16x128xf32>
    %cst_55 = arith.constant 0.000000e+00 : f32
    %265 = vector.broadcast %cst_55 : f32 to vector<16x128xf32>
    %266 = arith.maximumf %264, %265 : vector<16x128xf32>
    %267 = vector.broadcast %247 : vector<1x128xf32> to vector<16x128xf32>
    %268 = vector.broadcast %253 : vector<16x1xf32> to vector<16x128xf32>
    %269 = arith.maximumf %267, %268 : vector<16x128xf32>
    %270 = vector.broadcast %244 : vector<1x128xf32> to vector<16x128xf32>
    %271 = vector.broadcast %250 : vector<16x1xf32> to vector<16x128xf32>
    %272 = arith.minimumf %270, %271 : vector<16x128xf32>
    %273 = arith.subf %269, %272 : vector<16x128xf32>
    %cst_56 = arith.constant 0.000000e+00 : f32
    %274 = vector.broadcast %cst_56 : f32 to vector<16x128xf32>
    %275 = arith.maximumf %273, %274 : vector<16x128xf32>
    %276 = arith.mulf %240, %266 : vector<16x128xf32>
    %277 = arith.mulf %241, %275 : vector<16x128xf32>
    %278 = vector.broadcast %257 : vector<16x1xf32> to vector<16x128xf32>
    %279 = vector.broadcast %256 : vector<1x128xf32> to vector<16x128xf32>
    %280 = arith.addf %278, %279 : vector<16x128xf32>
    %281 = arith.subf %280, %276 : vector<16x128xf32>
    %282 = tpu.reciprocal %281 {approx = true} : vector<16x128xf32> -> vector<16x128xf32>
    %283 = arith.mulf %281, %282 : vector<16x128xf32>
    %cst_57 = arith.constant 2.000000e+00 : f32
    %284 = vector.broadcast %cst_57 : f32 to vector<16x128xf32>
    %285 = arith.subf %284, %283 : vector<16x128xf32>
    %286 = arith.mulf %282, %285 : vector<16x128xf32>
    %287 = arith.mulf %276, %286 : vector<16x128xf32>
    %288 = arith.subf %277, %281 : vector<16x128xf32>
    %289 = tpu.reciprocal %277 {approx = true} : vector<16x128xf32> -> vector<16x128xf32>
    %290 = arith.mulf %277, %289 : vector<16x128xf32>
    %cst_58 = arith.constant 2.000000e+00 : f32
    %291 = vector.broadcast %cst_58 : f32 to vector<16x128xf32>
    %292 = arith.subf %291, %290 : vector<16x128xf32>
    %293 = arith.mulf %289, %292 : vector<16x128xf32>
    %294 = arith.mulf %288, %293 : vector<16x128xf32>
    %295 = arith.subf %287, %294 : vector<16x128xf32>
    %cst_59 = arith.constant 0.000000e+00 : f32
    %296 = vector.broadcast %cst_59 : f32 to vector<16x128xf32>
    %297 = arith.subf %296, %295 : vector<16x128xf32>
    %cst_60 = arith.constant 1.000000e+00 : f32
    %298 = vector.broadcast %cst_60 : f32 to vector<16x128xf32>
    %299 = arith.mulf %298, %297 : vector<16x128xf32>
    %300 = arith.addf %173, %299 : vector<16x128xf32>
    %c0_61 = arith.constant 0 : index
    %c0_62 = arith.constant 0 : index
    %c0_63 = arith.constant 0 : index
    %301 = vector.load %arg6[%c0_61, %c0_62, %c0_63] : memref<1x16x128xf32, #tpu.memory_space<vmem>>, vector<1x16x128xf32>
    %302 = vector.shape_cast %301 : vector<1x16x128xf32> to vector<16x128xf32>
    %303 = vector.shape_cast %300 : vector<16x128xf32> to vector<1x16x128xf32>
    tpu.vector_store %arg6[%c0_61, %c0_62, %c0_63], %303 {strides = array<i32>} : memref<1x16x128xf32, #tpu.memory_space<vmem>>, vector<1x16x128xf32>,
    return
  }
  func.func @transform_0(%arg0: i32, %arg1: i32) -> (i32, i32, i32) {
    %c0_i32 = arith.constant 0 : i32
    %c0_i32_0 = arith.constant 0 : i32
    return %arg0, %c0_i32, %arg1 : i32, i32, i32
  }
  func.func @transform_1(%arg0: i32, %arg1: i32) -> (i32, i32, i32) {
    %c0_i32 = arith.constant 0 : i32
    %c0_i32_0 = arith.constant 0 : i32
    return %arg0, %c0_i32, %arg1 : i32, i32, i32
  }
  func.func @transform_2(%arg0: i32, %arg1: i32) -> (i32, i32, i32) {
    %c0_i32 = arith.constant 0 : i32
    %c0_i32_0 = arith.constant 0 : i32
    %c0_i32_1 = arith.constant 0 : i32
    return %arg0, %c0_i32, %c0_i32_0 : i32, i32, i32
  }
  func.func @transform_3(%arg0: i32, %arg1: i32) -> (i32, i32, i32) {
    %c0_i32 = arith.constant 0 : i32
    %c0_i32_0 = arith.constant 0 : i32
    %c0_i32_1 = arith.constant 0 : i32
    return %arg0, %c0_i32, %c0_i32_0 : i32, i32, i32
  }
  func.func @transform_4(%arg0: i32, %arg1: i32) -> (i32, i32, i32) {
    %c0_i32 = arith.constant 0 : i32
    %c0_i32_0 = arith.constant 0 : i32
    return %arg0, %c0_i32, %arg1 : i32, i32, i32
  }
}

</mosaic_0001>

<llo_original>
// kernel: tpu_custom_call.1
$region0: #{tpu_custom_call.1}
  #allocation0 [shape = 'u32[]', space=smem, size = 0x4, offset = 0x4, fixed_abs, tag = 'smem constant byte address 0x4 - core index']
  #allocation1 [shape = 'u32[72,128]{1,0:T(1,128)}', space=vmem, size = 0x9000, scoped, tag = 'internal scratch']
  %s0 = inlined_call_operand.vmem [shape: f32[2,8,128], index: 0, kind: input, shape index: {}]
  %s1 = inlined_call_operand.vmem [shape: f32[2,7,128], index: 1, kind: input, shape index: {}]
  %s2 = inlined_call_operand.vmem [shape: f32[2,16,1], index: 2, kind: input, shape index: {}]
  %s3 = inlined_call_operand.vmem [shape: f32[2,16,7], index: 3, kind: input, shape index: {}]
  %s4 = inlined_call_operand.hbm [shape: f32[2,16,128], index: 4, kind: output, shape index: {}]
  %s5 = sld [smem:[#allocation0]]
  $region49: #{tpu_custom_call.1} parent=0
    _
  %s7 = ssub.s32 1, %s5
  %s8 = scalar_select 0, %s7, %s5
  $region1: #{tpu_custom_call.1} parent=0
    #allocation2 [shape = 'u8[16384]{0}', space=vmem, size = 0x4000, scoped, tag = 'output window, operand 0']
    #allocation3 [shape = 's32[2]{0}', space=sflag, size = 0x8, scoped, tag = 'scoped memory for tpu_custom_call.1']
    %9 = vsyncpa [#allocation3], 0
    %s10 = scalar_lea.sflag [#allocation3], 1
    %11 = vsyncpa %s10, 0
    loop: start=0, step=1, limit=4
    $region2: #{tpu_custom_call.1} parent=1 // loop_pre_header
      _
    $region3: #{tpu_custom_call.1} parent=1 // loop_header
      %s13 = sphi 0, %s17
      %p14 = scmp.ge.s32.totalorder %s13, 4
      %s20 = sphi 0, %s32
      %s21 = sphi 0, %s28
      %s22 = sphi 0, %s20
      %s23 = sphi 0, %s21
      %s24 = sphi 0, %s22
      %s25 = sphi 0, %s23
      %s37 = sphi 0, %s39
      %s40 = sphi 0, %s37
      %s41 = sphi 0, %s40
      %s57 = sphi 0, %s41
      %s65 = sphi 0, %s67
      %s68 = sphi 0, %s65
      %s69 = sphi 0, %s68
      %s85 = sphi 0, %s69
      %s91 = sphi 0, %s93
      %s94 = sphi 0, %s91
      %s95 = sphi 0, %s94
      %s111 = sphi 0, %s95
      %s117 = sphi 0, %s119
      %s120 = sphi 0, %s117
      %s121 = sphi 0, %s120
      %s137 = sphi 0, %s121
      %s145 = sphi 0, %s147
      %s148 = sphi 0, %s145
      %s149 = sphi 0, %s148
      %s165 = sphi 0, %s149
    $region4: #{tpu_custom_call.1} parent=1 // loop_header_branch
      %16 = sbr.rel (%p14) target = $region8
    $region5: #{tpu_custom_call.1} parent=1 // loop_body
      %s18 = ssub.s32 %s13, 1
      %s19 = ssub.s32 %s13, 2
      %s26 = sadd.s32 1, %s21
      %p27 = scmp.ge.s32.totalorder %s26, 1
      %s28 = scalar_select %p27, 0, %s26
      %s29 = sadd.s32 1, %s20
      %s30 = scalar_select %p27, %s29, %s20
      %p31 = scmp.ge.s32.totalorder %s30, 2
      %s32 = scalar_select %p31, 0, %s30
      %s33 = ssub.s32 %s20, %s32
      %s34 = ssub.s32 %s21, %s28
      %s35 = sor.u32 %s33, %s34
      %p36 = scmp.eq.s32.totalorder %s35, 0
      %s38 = sadd.s32 %s37, 1
      %s39 = scalar_select %p36, %s37, %s38
      %p42 = pneg %p36
      %p43 = scmp.eq.s32.totalorder %s13, 1
      %p44 = por %p42, %p43
      %p45 = scmp.ne.s32.totalorder %s37, %s40
      %p46 = scmp.eq.s32.totalorder %s13, 0
      %p47 = por %p45, %p46
      %p48 = scmp.ne.s32.totalorder %s37, %s40
      %p49 = scmp.eq.s32.totalorder %s18, 1
      %p50 = por %p48, %p49
      %p51 = scmp.ne.s32.totalorder %s40, %s41
      %p52 = scmp.eq.s32.totalorder %s18, 0
      %p53 = por %p51, %p52
      %p54 = scmp.ne.s32.totalorder %s40, %s41
      %p55 = scmp.eq.s32.totalorder %s19, 1
      %p56 = por %p54, %p55
      %p58 = scmp.ne.s32.totalorder %s41, %s57
      %p59 = scmp.eq.s32.totalorder %s19, 0
      %p60 = por %p58, %p59
      %s61 = ssub.s32 %s20, %s32
      %s62 = ssub.s32 %s21, %s28
      %s63 = sor.u32 %s61, %s62
      %p64 = scmp.eq.s32.totalorder %s63, 0
      %s66 = sadd.s32 %s65, 1
      %s67 = scalar_select %p64, %s65, %s66
      %p70 = pneg %p64
      %p71 = scmp.eq.s32.totalorder %s13, 1
      %p72 = por %p70, %p71
      %p73 = scmp.ne.s32.totalorder %s65, %s68
      %p74 = scmp.eq.s32.totalorder %s13, 0
      %p75 = por %p73, %p74
      %p76 = scmp.ne.s32.totalorder %s65, %s68
      %p77 = scmp.eq.s32.totalorder %s18, 1
      %p78 = por %p76, %p77
      %p79 = scmp.ne.s32.totalorder %s68, %s69
      %p80 = scmp.eq.s32.totalorder %s18, 0
      %p81 = por %p79, %p80
      %p82 = scmp.ne.s32.totalorder %s68, %s69
      %p83 = scmp.eq.s32.totalorder %s19, 1
      %p84 = por %p82, %p83
      %p86 = scmp.ne.s32.totalorder %s69, %s85
      %p87 = scmp.eq.s32.totalorder %s19, 0
      %p88 = por %p86, %p87
      %s89 = ssub.s32 %s20, %s32
      %p90 = scmp.eq.s32.totalorder %s89, 0
      %s92 = sadd.s32 %s91, 1
      %s93 = scalar_select %p90, %s91, %s92
      %p96 = pneg %p90
      %p97 = scmp.eq.s32.totalorder %s13, 1
      %p98 = por %p96, %p97
      %p99 = scmp.ne.s32.totalorder %s91, %s94
      %p100 = scmp.eq.s32.totalorder %s13, 0
      %p101 = por %p99, %p100
      %p102 = scmp.ne.s32.totalorder %s91, %s94
      %p103 = scmp.eq.s32.totalorder %s18, 1
      %p104 = por %p102, %p103
      %p105 = scmp.ne.s32.totalorder %s94, %s95
      %p106 = scmp.eq.s32.totalorder %s18, 0
      %p107 = por %p105, %p106
      %p108 = scmp.ne.s32.totalorder %s94, %s95
      %p109 = scmp.eq.s32.totalorder %s19, 1
      %p110 = por %p108, %p109
      %p112 = scmp.ne.s32.totalorder %s95, %s111
      %p113 = scmp.eq.s32.totalorder %s19, 0
      %p114 = por %p112, %p113
      %s115 = ssub.s32 %s20, %s32
      %p116 = scmp.eq.s32.totalorder %s115, 0
      %s118 = sadd.s32 %s117, 1
      %s119 = scalar_select %p116, %s117, %s118
      %p122 = pneg %p116
      %p123 = scmp.eq.s32.totalorder %s13, 1
      %p124 = por %p122, %p123
      %p125 = scmp.ne.s32.totalorder %s117, %s120
      %p126 = scmp.eq.s32.totalorder %s13, 0
      %p127 = por %p125, %p126
      %p128 = scmp.ne.s32.totalorder %s117, %s120
      %p129 = scmp.eq.s32.totalorder %s18, 1
      %p130 = por %p128, %p129
      %p131 = scmp.ne.s32.totalorder %s120, %s121
      %p132 = scmp.eq.s32.totalorder %s18, 0
      %p133 = por %p131, %p132
      %p134 = scmp.ne.s32.totalorder %s120, %s121
      %p135 = scmp.eq.s32.totalorder %s19, 1
      %p136 = por %p134, %p135
      %p138 = scmp.ne.s32.totalorder %s121, %s137
      %p139 = scmp.eq.s32.totalorder %s19, 0
      %p140 = por %p138, %p139
      %s141 = ssub.s32 %s20, %s32
      %s142 = ssub.s32 %s21, %s28
      %s143 = sor.u32 %s141, %s142
      %p144 = scmp.eq.s32.totalorder %s143, 0
      %s146 = sadd.s32 %s145, 1
      %s147 = scalar_select %p144, %s145, %s146
      %p150 = pneg %p144
      %p151 = scmp.eq.s32.totalorder %s13, 1
      %p152 = por %p150, %p151
      %p153 = scmp.ne.s32.totalorder %s145, %s148
      %p154 = scmp.eq.s32.totalorder %s13, 0
      %p155 = por %p153, %p154
      %p156 = scmp.ne.s32.totalorder %s145, %s148
      %p157 = scmp.eq.s32.totalorder %s18, 1
      %p158 = por %p156, %p157
      %p159 = scmp.ne.s32.totalorder %s148, %s149
      %p160 = scmp.eq.s32.totalorder %s18, 0
      %p161 = por %p159, %p160
      %p162 = scmp.ne.s32.totalorder %s148, %s149
      %p163 = scmp.eq.s32.totalorder %s19, 1
      %p164 = por %p162, %p163
      %p166 = scmp.ne.s32.totalorder %s149, %s165
      %p167 = scmp.eq.s32.totalorder %s19, 0
      %p168 = por %p166, %p167
      %p169 = scmp.le.s32.totalorder 1, %s13
      %p170 = scmp.lt.s32.totalorder %s13, 3
      %p171 = pnand %p169, %p170
      %p172 = pneg %p171
      // Predicated region
      $region9: #{tpu_custom_call.1} parent=5 // pred_check
        _
      $region10: #{tpu_custom_call.1} parent=5 // pred_check_branch
        %174 = sbr.rel (%p171) target = $region12
      $region11: #{tpu_custom_call.1} parent=5 // pred_region
        %s175 = ssub.s32 %s13, 1
      $region12: #{tpu_custom_call.1} parent=5 // pred_fallthru
        _
      %p176 = scmp.lt.s32.totalorder %s13, 2
      // Predicated region
      $region13: #{tpu_custom_call.1} parent=5 // pred_check
        %p177 = pneg %p176
      $region14: #{tpu_custom_call.1} parent=5 // pred_check_branch
        %179 = sbr.rel (%p177) target = $region16
      $region15: #{tpu_custom_call.1} parent=5 // pred_region
        // Predicated region
        $region17: #{tpu_custom_call.1} parent=15 // pred_check
          %p180 = pneg %p47
        $region18: #{tpu_custom_call.1} parent=15 // pred_check_branch
          %182 = sbr.rel (%p180) target = $region20
        $region19: #{tpu_custom_call.1} parent=15 // pred_region
          %p183 = scmp.lt.s32.totalorder %s20, 1
          %s184 = scalar_select %p183, %s20, 1
          %p185 = scmp.lt.s32.totalorder %s21, 0
          %s186 = scalar_select %p185, %s21, 0
          %s187 = sadd.s32 %s186, %s184
          %s188 = smul.addr %s187, 8
          %s189 = scalar_lea.vmem %s0, %s188
        $region20: #{tpu_custom_call.1} parent=15 // pred_fallthru
          _
        // Predicated region
        $region21: #{tpu_custom_call.1} parent=15 // pred_check
          %p190 = pneg %p75
        $region22: #{tpu_custom_call.1} parent=15 // pred_check_branch
          %192 = sbr.rel (%p190) target = $region24
        $region23: #{tpu_custom_call.1} parent=15 // pred_region
          %p193 = scmp.lt.s32.totalorder %s20, 1
          %s194 = scalar_select %p193, %s20, 1
          %p195 = scmp.lt.s32.totalorder %s21, 0
          %s196 = scalar_select %p195, %s21, 0
          %s197 = sadd.s32 %s196, %s194
          %s198 = smul.addr %s197, 8
          %s199 = scalar_lea.vmem %s1, %s198
        $region24: #{tpu_custom_call.1} parent=15 // pred_fallthru
          _
        // Predicated region
        $region25: #{tpu_custom_call.1} parent=15 // pred_check
          %p200 = pneg %p101
        $region26: #{tpu_custom_call.1} parent=15 // pred_check_branch
          %202 = sbr.rel (%p200) target = $region28
        $region27: #{tpu_custom_call.1} parent=15 // pred_region
          %p203 = scmp.lt.s32.totalorder %s20, 1
          %s204 = scalar_select %p203, %s20, 1
          %s205 = smul.addr %s204, 2
          %s206 = smul.addr %s205, 8
          %s207 = scalar_lea.vmem %s2, %s206
        $region28: #{tpu_custom_call.1} parent=15 // pred_fallthru
          _
        // Predicated region
        $region29: #{tpu_custom_call.1} parent=15 // pred_check
          %p208 = pneg %p127
        $region30: #{tpu_custom_call.1} parent=15 // pred_check_branch
          %210 = sbr.rel (%p208) target = $region32
        $region31: #{tpu_custom_call.1} parent=15 // pred_region
          %p211 = scmp.lt.s32.totalorder %s20, 1
          %s212 = scalar_select %p211, %s20, 1
          %s213 = smul.addr %s212, 2
          %s214 = smul.addr %s213, 8
          %s215 = scalar_lea.vmem %s3, %s214
        $region32: #{tpu_custom_call.1} parent=15 // pred_fallthru
          _
      $region16: #{tpu_custom_call.1} parent=5 // pred_fallthru
        _
      %p216 = scmp.le.s32.totalorder 1, %s13
      %p217 = scmp.lt.s32.totalorder %s13, 3
      %p218 = pnand %p216, %p217
      %p219 = pneg %p218
      // Predicated region
      $region33: #{tpu_custom_call.1} parent=5 // pred_check
        _
      $region34: #{tpu_custom_call.1} parent=5 // pred_check_branch
        %221 = sbr.rel (%p218) target = $region36
      $region35: #{tpu_custom_call.1} parent=5 // pred_region
        %s222 = ssub.s32 %s13, 1
        %p223 = scmp.lt.s32.totalorder %s22, 1
        %s224 = scalar_select %p223, %s22, 1
        %p225 = scmp.lt.s32.totalorder %s23, 0
        %s226 = scalar_select %p225, %s23, 0
        %s227 = sadd.s32 %s226, %s224
        %s228 = smul.addr %s227, 8
        %s229 = scalar_lea.vmem %s0, %s228
        %p230 = pneg %p53
        %p231 = pneg %p50
        %p232 = scmp.lt.s32.totalorder %s22, 1
        %s233 = scalar_select %p232, %s22, 1
        %p234 = scmp.lt.s32.totalorder %s23, 0
        %s235 = scalar_select %p234, %s23, 0
        %s236 = sadd.s32 %s235, %s233
        %s237 = smul.addr %s236, 8
        %s238 = scalar_lea.vmem %s1, %s237
        %p239 = pneg %p81
        %p240 = pneg %p78
        %p241 = scmp.lt.s32.totalorder %s22, 1
        %s242 = scalar_select %p241, %s22, 1
        %s243 = smul.addr %s242, 2
        %s244 = smul.addr %s243, 8
        %s245 = scalar_lea.vmem %s2, %s244
        %p246 = pneg %p107
        %p247 = pneg %p104
        %p248 = scmp.lt.s32.totalorder %s22, 1
        %s249 = scalar_select %p248, %s22, 1
        %s250 = smul.addr %s249, 2
        %s251 = smul.addr %s250, 8
        %s252 = scalar_lea.vmem %s3, %s251
        %p253 = pneg %p133
        %p254 = pneg %p130
        %p255 = pneg %p161
        %p256 = pneg %p158
        %s257 = sand.u32 %s148, 1
        %s258 = scalar_lea.sflag [#allocation3], %s257
        %s259 = sand.u32 %s148, 1
        %s260 = smul.addr %s259, 16
        %s261 = scalar_lea.vmem [#allocation2], %s260
        %p262 = scmp.lt.s32.totalorder %s22, 1
        %s263 = scalar_select %p262, %s22, 1
        %p264 = scmp.lt.s32.totalorder %s23, 0
        %s265 = scalar_select %p264, %s23, 0
        %s266 = sadd.s32 %s265, %s263
        %s267 = smul.addr %s266, 8
        %s268 = scalar_lea.vmem %s0, %s267
        %p269 = scmp.lt.s32.totalorder %s22, 1
        %s270 = scalar_select %p269, %s22, 1
        %p271 = scmp.lt.s32.totalorder %s23, 0
        %s272 = scalar_select %p271, %s23, 0
        %s273 = sadd.s32 %s272, %s270
        %s274 = smul.addr %s273, 8
        %s275 = scalar_lea.vmem %s1, %s274
        %p276 = scmp.lt.s32.totalorder %s22, 1
        %s277 = scalar_select %p276, %s22, 1
        %s278 = smul.addr %s277, 2
        %s279 = smul.addr %s278, 8
        %s280 = scalar_lea.vmem %s2, %s279
        %p281 = scmp.lt.s32.totalorder %s22, 1
        %s282 = scalar_select %p281, %s22, 1
        %s283 = smul.addr %s282, 2
        %s284 = smul.addr %s283, 8
        %s285 = scalar_lea.vmem %s3, %s284
        %v286 = vld [vmem:[%s268] sm:$0xff]
        %v287 = vld [vmem:[%s275] sm:$0x7f]
        %vm288 = vcmp.ne.f32.partialorder %v287, %v287
        %v289 = vsel %vm288, 0.0, %v287
        %vm290 = vcmp.eq.f32.partialorder %v289, inf
        %v291 = vsel %vm290, 3.4028235e+38, %v289
        %vm292 = vcmp.eq.f32.partialorder %v291, -inf
        %v293 = vsel %vm292, -3.4028235e+38, %v291
        %v294 = vld [vmem:[%s280] sm:$0xff]
        %v295 = vld [vmem:[%s280 + $0x8] sm:$0xff]
        %v296 = vld [vmem:[%s285] sm:$0xff]
        %v297 = vld [vmem:[%s285 + $0x8] sm:$0xff]
        %vm298 = vcmp.ne.f32.partialorder %v296, %v296
        %vm299 = vcmp.ne.f32.partialorder %v297, %v297
        %v300 = vsel %vm298, 0.0, %v296
        %v301 = vsel %vm299, 0.0, %v297
        %vm302 = vcmp.eq.f32.partialorder %v300, inf
        %vm303 = vcmp.eq.f32.partialorder %v301, inf
        %v304 = vsel %vm302, 3.4028235e+38, %v300
        %v305 = vsel %vm303, 3.4028235e+38, %v301
        %vm306 = vcmp.eq.f32.partialorder %v304, -inf
        %vm307 = vcmp.eq.f32.partialorder %v305, -inf
        %v308 = vsel %vm306, -3.4028235e+38, %v304
        %v309 = vsel %vm307, -3.4028235e+38, %v305
        %v310 = vxor.u32 %v286, 2147483648
        %v311 = vmul.f32 %v310, 1.442695
        %v312 = vpow.pop %v311
        %v313 = vadd.f32 %v312, 1.0
        %v314 = vrcp.pop %v313
        %v315 = vmul.f32 %v313, %v314
        %v316 = vsub.f32 1.0, %v315
        %v317 = vmul.f32 %v314, %v316
        %v318 = vadd.f32 %v314, %v317
        %vm319 = vweird.f32 %v313
        %vm320 = vweird.f32 %v314
        %vm321 = vmor %vm319, %vm320
        %v322 = vsel %vm321, %v314, %v318
        %v323 = vand.u32 2147483647, %v313
        %vm324 = vcmp.eq.f32.partialorder %v323, 8.507059e+37
        %v325 = vand.u32 %v313, 2147483648
        %v326 = vor.u32 1.1754944e-38, %v325
        %v327 = vsel %vm324, %v326, %v322
        %v328 = vmul.f32 1.0, %v327
        %v329 = vsub.f32 1.0, %v328
        %v330 = vadd.f32 %v329, 1e-08
        %v331 = vlog2.pop %v330
        %v332 = vmul.f32 %v331, 0.6931472
        %v333 = vadd.f32 %v286, %v332
        %v334 = vmul.f32 %v328, %v328
        %v335 = vmul.f32 %v329, %v329
        %v336 = vmul.f32 %v334, 0.75
        %v337 = vsub.f32 0.0, %v332
        %v338 = vmul.f32 %v336, %v337
        %v339 = vmul.f32 %v335, 0.25
        %v340 = vsub.f32 0.0, %v333
        %v341 = vmul.f32 %v339, %v340
        %v342 = vsub.f32 %v341, %v338
        %vm343 = vcmp.eq.f32.partialorder %v294, 0.0
        %vm344 = vcmp.eq.f32.partialorder %v295, 0.0
        %v345 = vsel %vm343, 1, 0
        %v346 = vsel %vm344, 1, 0
        %347 = vset.pattern.permute.xlu0 0
        %348 = vperm.xlu0 %347, %v345
        %v349 = vpop.permute.xlu0 %348
        %350 = vset.pattern.permute.xlu0 0
        %351 = vperm.xlu0 %350, %v346
        %v352 = vpop.permute.xlu0 %351
        %vm353 = vcmp.eq.s32.totalorder %v349, 1
        %vm354 = vcmp.eq.s32.totalorder %v352, 1
        %v355 = vperm.slane %v342, 0
        %v356 = vsel %vm353, %v355, 0.0
        %v357 = vsel %vm354, %v355, 0.0
        %vm358 = vcmp.eq.f32.partialorder %v294, 1.0
        %vm359 = vcmp.eq.f32.partialorder %v295, 1.0
        %v360 = vsel %vm358, 1, 0
        %v361 = vsel %vm359, 1, 0
        %362 = vset.pattern.permute.xlu0 0
        %363 = vperm.xlu0 %362, %v360
        %v364 = vpop.permute.xlu0 %363
        %365 = vset.pattern.permute.xlu0 0
        %366 = vperm.xlu0 %365, %v361
        %v367 = vpop.permute.xlu0 %366
        %vm368 = vcmp.eq.s32.totalorder %v364, 1
        %vm369 = vcmp.eq.s32.totalorder %v367, 1
        %v370 = vperm.slane %v342, 1
        %v371 = vsel %vm368, %v370, %v356
        %v372 = vsel %vm369, %v370, %v357
        %vm373 = vcmp.eq.f32.partialorder %v294, 2.0
        %vm374 = vcmp.eq.f32.partialorder %v295, 2.0
        %v375 = vsel %vm373, 1, 0
        %v376 = vsel %vm374, 1, 0
        %377 = vset.pattern.permute.xlu0 0
        %378 = vperm.xlu0 %377, %v375
        %v379 = vpop.permute.xlu0 %378
        %380 = vset.pattern.permute.xlu0 0
        %381 = vperm.xlu0 %380, %v376
        %v382 = vpop.permute.xlu0 %381
        %vm383 = vcmp.eq.s32.totalorder %v379, 1
        %vm384 = vcmp.eq.s32.totalorder %v382, 1
        %v385 = vperm.slane %v342, 2
        %v386 = vsel %vm383, %v385, %v371
        %v387 = vsel %vm384, %v385, %v372
        %vm388 = vcmp.eq.f32.partialorder %v294, 3.0
        %vm389 = vcmp.eq.f32.partialorder %v295, 3.0
        %v390 = vsel %vm388, 1, 0
        %v391 = vsel %vm389, 1, 0
        %392 = vset.pattern.permute.xlu0 0
        %393 = vperm.xlu0 %392, %v390
        %v394 = vpop.permute.xlu0 %393
        %395 = vset.pattern.permute.xlu0 0
        %396 = vperm.xlu0 %395, %v391
        %v397 = vpop.permute.xlu0 %396
        %vm398 = vcmp.eq.s32.totalorder %v394, 1
        %vm399 = vcmp.eq.s32.totalorder %v397, 1
        %v400 = vperm.slane %v342, 3
        %v401 = vsel %vm398, %v400, %v386
        %v402 = vsel %vm399, %v400, %v387
        %vm403 = vcmp.eq.f32.partialorder %v294, 4.0
        %vm404 = vcmp.eq.f32.partialorder %v295, 4.0
        %v405 = vsel %vm403, 1, 0
        %v406 = vsel %vm404, 1, 0
        %407 = vset.pattern.permute.xlu0 0
        %408 = vperm.xlu0 %407, %v405
        %v409 = vpop.permute.xlu0 %408
        %410 = vset.pattern.permute.xlu0 0
        %411 = vperm.xlu0 %410, %v406
        %v412 = vpop.permute.xlu0 %411
        %vm413 = vcmp.eq.s32.totalorder %v409, 1
        %vm414 = vcmp.eq.s32.totalorder %v412, 1
        %v415 = vperm.slane %v342, 4
        %v416 = vsel %vm413, %v415, %v401
        %v417 = vsel %vm414, %v415, %v402
        %vm418 = vcmp.eq.f32.partialorder %v294, 5.0
        %vm419 = vcmp.eq.f32.partialorder %v295, 5.0
        %v420 = vsel %vm418, 1, 0
        %v421 = vsel %vm419, 1, 0
        %422 = vset.pattern.permute.xlu0 0
        %423 = vperm.xlu0 %422, %v420
        %v424 = vpop.permute.xlu0 %423
        %425 = vset.pattern.permute.xlu0 0
        %426 = vperm.xlu0 %425, %v421
        %v427 = vpop.permute.xlu0 %426
        %vm428 = vcmp.eq.s32.totalorder %v424, 1
        %vm429 = vcmp.eq.s32.totalorder %v427, 1
        %v430 = vperm.slane %v342, 5
        %v431 = vsel %vm428, %v430, %v416
        %v432 = vsel %vm429, %v430, %v417
        %vm433 = vcmp.eq.f32.partialorder %v294, 6.0
        %vm434 = vcmp.eq.f32.partialorder %v295, 6.0
        %v435 = vsel %vm433, 1, 0
        %v436 = vsel %vm434, 1, 0
        %437 = vset.pattern.permute.xlu0 0
        %438 = vperm.xlu0 %437, %v435
        %v439 = vpop.permute.xlu0 %438
        %440 = vset.pattern.permute.xlu0 0
        %441 = vperm.xlu0 %440, %v436
        %v442 = vpop.permute.xlu0 %441
        %vm443 = vcmp.eq.s32.totalorder %v439, 1
        %vm444 = vcmp.eq.s32.totalorder %v442, 1
        %v445 = vperm.slane %v342, 6
        %v446 = vsel %vm443, %v445, %v431
        %v447 = vsel %vm444, %v445, %v432
        %vm448 = vcmp.eq.f32.partialorder %v294, 7.0
        %vm449 = vcmp.eq.f32.partialorder %v295, 7.0
        %v450 = vsel %vm448, 1, 0
        %v451 = vsel %vm449, 1, 0
        %452 = vset.pattern.permute.xlu0 0
        %453 = vperm.xlu0 %452, %v450
        %v454 = vpop.permute.xlu0 %453
        %455 = vset.pattern.permute.xlu0 0
        %456 = vperm.xlu0 %455, %v451
        %v457 = vpop.permute.xlu0 %456
        %vm458 = vcmp.eq.s32.totalorder %v454, 1
        %vm459 = vcmp.eq.s32.totalorder %v457, 1
        %v460 = vperm.slane %v342, 7
        %v461 = vsel %vm458, %v460, %v446
        %v462 = vsel %vm459, %v460, %v447
        %464 = vset.pattern.permute.xlu0 0
        %465 = vperm.xlu0 %464, %v308
        %v466 = vpop.permute.xlu0 %465
        %469 = vset.pattern.permute.xlu0 0
        %470 = vperm.xlu0 %469, %v309
        %v471 = vpop.permute.xlu0 %470
        %v473 = vperm.slane %v293, 0
        %v474 = vsub.f32 %v466, %v473
        %v475 = vsub.f32 %v471, %v473
        %v476 = vand.u32 2147483647, %v474
        %v477 = vand.u32 2147483647, %v475
        %478 = vset.pattern.permute.xlu0 1
        %479 = vperm.xlu0 %478, %v308
        %v480 = vpop.permute.xlu0 %479
        %482 = vset.pattern.permute.xlu0 1
        %483 = vperm.xlu0 %482, %v309
        %v484 = vpop.permute.xlu0 %483
        %v486 = vperm.slane %v293, 1
        %v487 = vsub.f32 %v480, %v486
        %v488 = vsub.f32 %v484, %v486
        %v489 = vand.u32 2147483647, %v487
        %v490 = vand.u32 2147483647, %v488
        %v491 = vadd.f32 %v476, %v489
        %v492 = vadd.f32 %v477, %v490
        %493 = vset.pattern.permute.xlu0 2
        %494 = vperm.xlu0 %493, %v308
        %v495 = vpop.permute.xlu0 %494
        %497 = vset.pattern.permute.xlu0 2
        %498 = vperm.xlu0 %497, %v309
        %v499 = vpop.permute.xlu0 %498
        %v501 = vperm.slane %v293, 2
        %v502 = vsub.f32 %v495, %v501
        %v503 = vsub.f32 %v499, %v501
        %v504 = vand.u32 2147483647, %v502
        %v505 = vand.u32 2147483647, %v503
        %v506 = vadd.f32 %v491, %v504
        %v507 = vadd.f32 %v492, %v505
        %508 = vset.pattern.permute.xlu0 3
        %509 = vperm.xlu0 %508, %v308
        %v510 = vpop.permute.xlu0 %509
        %512 = vset.pattern.permute.xlu0 3
        %513 = vperm.xlu0 %512, %v309
        %v514 = vpop.permute.xlu0 %513
        %v516 = vperm.slane %v293, 3
        %v517 = vsub.f32 %v510, %v516
        %v518 = vsub.f32 %v514, %v516
        %v519 = vand.u32 2147483647, %v517
        %v520 = vand.u32 2147483647, %v518
        %v521 = vadd.f32 %v506, %v519
        %v522 = vadd.f32 %v507, %v520
        %523 = vset.pattern.permute.xlu0 4
        %524 = vperm.xlu0 %523, %v308
        %v525 = vpop.permute.xlu0 %524
        %527 = vset.pattern.permute.xlu0 4
        %528 = vperm.xlu0 %527, %v309
        %v529 = vpop.permute.xlu0 %528
        %v531 = vperm.slane %v293, 4
        %v532 = vsub.f32 %v525, %v531
        %v533 = vsub.f32 %v529, %v531
        %v534 = vand.u32 2147483647, %v532
        %v535 = vand.u32 2147483647, %v533
        %v536 = vadd.f32 %v521, %v534
        %v537 = vadd.f32 %v522, %v535
        %538 = vset.pattern.permute.xlu0 5
        %539 = vperm.xlu0 %538, %v308
        %v540 = vpop.permute.xlu0 %539
        %542 = vset.pattern.permute.xlu0 5
        %543 = vperm.xlu0 %542, %v309
        %v544 = vpop.permute.xlu0 %543
        %v546 = vperm.slane %v293, 5
        %v547 = vsub.f32 %v540, %v546
        %v548 = vsub.f32 %v544, %v546
        %v549 = vand.u32 2147483647, %v547
        %v550 = vand.u32 2147483647, %v548
        %v551 = vadd.f32 %v536, %v549
        %v552 = vadd.f32 %v537, %v550
        %v553 = vadd.f32 %v461, %v551
        %v554 = vadd.f32 %v462, %v552
        %555 = vset.pattern.permute.xlu0 6
        %556 = vperm.xlu0 %555, %v308
        %v557 = vpop.permute.xlu0 %556
        %559 = vset.pattern.permute.xlu0 6
        %560 = vperm.xlu0 %559, %v309
        %v561 = vpop.permute.xlu0 %560
        %v563 = vperm.slane %v293, 6
        %v564 = vsub.f32 %v557, %v563
        %v565 = vsub.f32 %v561, %v563
        %v566 = vand.u32 2147483647, %v564
        %v567 = vand.u32 2147483647, %v565
        %v568 = vadd.f32 %v553, %v566
        %v569 = vadd.f32 %v554, %v567
        %v570 = vmul.f32 %v293, 0.5
        %v572 = vrot.slane %v570, 3
        %v574 = vsub.f32 %v293, %v572
        %v575 = vadd.f32 %v293, %v572
        %v576 = vmul.f32 %v308, 0.5
        %v577 = vmul.f32 %v309, 0.5
        %580 = vrot.lane.b32.xlu0 %v576, 125
        %v581 = vpop.permute.xlu0 %580
        %582 = vrot.lane.b32.xlu0 %v577, 125
        %v583 = vpop.permute.xlu0 %582
        %v586 = vsub.f32 %v308, %v581
        %v587 = vsub.f32 %v309, %v583
        %v588 = vadd.f32 %v308, %v581
        %v589 = vadd.f32 %v309, %v583
        %v590 = vsub.f32 %v575, %v574
        %v591 = vsub.f32 %v588, %v586
        %v592 = vsub.f32 %v589, %v587
        %v593 = vperm.slane %v575, 0
        %595 = vset.pattern.permute.xlu0 0
        %596 = vperm.xlu0 %595, %v588
        %v597 = vpop.permute.xlu0 %596
        %600 = vset.pattern.permute.xlu0 0
        %601 = vperm.xlu0 %600, %v589
        %v602 = vpop.permute.xlu0 %601
        %v604 = vmin.f32 %v593, %v597
        %v605 = vmin.f32 %v593, %v602
        %v606 = vperm.slane %v574, 0
        %608 = vset.pattern.permute.xlu0 0
        %609 = vperm.xlu0 %608, %v586
        %v610 = vpop.permute.xlu0 %609
        %613 = vset.pattern.permute.xlu0 0
        %614 = vperm.xlu0 %613, %v587
        %v615 = vpop.permute.xlu0 %614
        %v617 = vmax.f32 %v606, %v610
        %v618 = vmax.f32 %v606, %v615
        %v619 = vsub.f32 %v604, %v617
        %v620 = vsub.f32 %v605, %v618
        %v621 = vmax.f32 %v619, 0.0
        %v622 = vmax.f32 %v620, 0.0
        %v623 = vmax.f32 %v593, %v597
        %v624 = vmax.f32 %v593, %v602
        %v625 = vmin.f32 %v606, %v610
        %v626 = vmin.f32 %v606, %v615
        %v627 = vsub.f32 %v623, %v625
        %v628 = vsub.f32 %v624, %v626
        %v629 = vmax.f32 %v627, 0.0
        %v630 = vmax.f32 %v628, 0.0
        %v632 = vrot.slane %v590, 1
        %v634 = vmul.f32 %v590, %v632
        %637 = vrot.lane.b32.xlu0 %v591, 127
        %v638 = vpop.permute.xlu0 %637
        %639 = vrot.lane.b32.xlu0 %v592, 127
        %v640 = vpop.permute.xlu0 %639
        %v643 = vmul.f32 %v591, %v638
        %v644 = vmul.f32 %v592, %v640
        %v645 = vperm.slane %v575, 1
        %646 = vset.pattern.permute.xlu0 1
        %647 = vperm.xlu0 %646, %v588
        %v648 = vpop.permute.xlu0 %647
        %650 = vset.pattern.permute.xlu0 1
        %651 = vperm.xlu0 %650, %v589
        %v652 = vpop.permute.xlu0 %651
        %v654 = vmin.f32 %v645, %v648
        %v655 = vmin.f32 %v645, %v652
        %v656 = vperm.slane %v574, 1
        %657 = vset.pattern.permute.xlu0 1
        %658 = vperm.xlu0 %657, %v586
        %v659 = vpop.permute.xlu0 %658
        %661 = vset.pattern.permute.xlu0 1
        %662 = vperm.xlu0 %661, %v587
        %v663 = vpop.permute.xlu0 %662
        %v665 = vmax.f32 %v656, %v659
        %v666 = vmax.f32 %v656, %v663
        %v667 = vsub.f32 %v654, %v665
        %v668 = vsub.f32 %v655, %v666
        %v669 = vmax.f32 %v667, 0.0
        %v670 = vmax.f32 %v668, 0.0
        %v671 = vmax.f32 %v645, %v648
        %v672 = vmax.f32 %v645, %v652
        %v673 = vmin.f32 %v656, %v659
        %v674 = vmin.f32 %v656, %v663
        %v675 = vsub.f32 %v671, %v673
        %v676 = vsub.f32 %v672, %v674
        %v677 = vmax.f32 %v675, 0.0
        %v678 = vmax.f32 %v676, 0.0
        %v679 = vmul.f32 %v621, %v669
        %v680 = vmul.f32 %v622, %v670
        %v681 = vmul.f32 %v629, %v677
        %v682 = vmul.f32 %v630, %v678
        %v683 = vrot.slane %v590, 2
        %v685 = vmul.f32 %v634, %v683
        %686 = vrot.lane.b32.xlu0 %v591, 126
        %v687 = vpop.permute.xlu0 %686
        %688 = vrot.lane.b32.xlu0 %v592, 126
        %v689 = vpop.permute.xlu0 %688
        %v692 = vmul.f32 %v643, %v687
        %v693 = vmul.f32 %v644, %v689
        %v694 = vperm.slane %v575, 2
        %695 = vset.pattern.permute.xlu0 2
        %696 = vperm.xlu0 %695, %v588
        %v697 = vpop.permute.xlu0 %696
        %699 = vset.pattern.permute.xlu0 2
        %700 = vperm.xlu0 %699, %v589
        %v701 = vpop.permute.xlu0 %700
        %v703 = vmin.f32 %v694, %v697
        %v704 = vmin.f32 %v694, %v701
        %v705 = vperm.slane %v574, 2
        %706 = vset.pattern.permute.xlu0 2
        %707 = vperm.xlu0 %706, %v586
        %v708 = vpop.permute.xlu0 %707
        %710 = vset.pattern.permute.xlu0 2
        %711 = vperm.xlu0 %710, %v587
        %v712 = vpop.permute.xlu0 %711
        %v714 = vmax.f32 %v705, %v708
        %v715 = vmax.f32 %v705, %v712
        %v716 = vsub.f32 %v703, %v714
        %v717 = vsub.f32 %v704, %v715
        %v718 = vmax.f32 %v716, 0.0
        %v719 = vmax.f32 %v717, 0.0
        %v720 = vmax.f32 %v694, %v697
        %v721 = vmax.f32 %v694, %v701
        %v722 = vmin.f32 %v705, %v708
        %v723 = vmin.f32 %v705, %v712
        %v724 = vsub.f32 %v720, %v722
        %v725 = vsub.f32 %v721, %v723
        %v726 = vmax.f32 %v724, 0.0
        %v727 = vmax.f32 %v725, 0.0
        %v728 = vmul.f32 %v679, %v718
        %v729 = vmul.f32 %v680, %v719
        %v730 = vmul.f32 %v681, %v726
        %v731 = vmul.f32 %v682, %v727
        %733 = vset.pattern.permute.xlu0 0
        %734 = vperm.xlu0 %733, %v692
        %v735 = vpop.permute.xlu0 %734
        %738 = vset.pattern.permute.xlu0 0
        %739 = vperm.xlu0 %738, %v693
        %v740 = vpop.permute.xlu0 %739
        %v742 = vperm.slane %v685, 0
        %v743 = vadd.f32 %v735, %v742
        %v744 = vadd.f32 %v740, %v742
        %v745 = vsub.f32 %v743, %v728
        %v746 = vsub.f32 %v744, %v729
        %v747 = vrcp.pop %v745
        %v748 = vrcp.pop %v746
        %v749 = vmul.f32 %v745, %v747
        %v750 = vmul.f32 %v746, %v748
        %v751 = vsub.f32 2.0, %v749
        %v752 = vsub.f32 2.0, %v750
        %v753 = vmul.f32 %v747, %v751
        %v754 = vmul.f32 %v748, %v752
        %v755 = vmul.f32 %v728, %v753
        %v756 = vmul.f32 %v729, %v754
        %v757 = vsub.f32 %v730, %v745
        %v758 = vsub.f32 %v731, %v746
        %v759 = vrcp.pop %v730
        %v760 = vrcp.pop %v731
        %v761 = vmul.f32 %v730, %v759
        %v762 = vmul.f32 %v731, %v760
        %v763 = vsub.f32 2.0, %v761
        %v764 = vsub.f32 2.0, %v762
        %v765 = vmul.f32 %v759, %v763
        %v766 = vmul.f32 %v760, %v764
        %v767 = vmul.f32 %v757, %v765
        %v768 = vmul.f32 %v758, %v766
        %v769 = vsub.f32 %v755, %v767
        %v770 = vsub.f32 %v756, %v768
        %v771 = vsub.f32 0.0, %v769
        %v772 = vsub.f32 0.0, %v770
        %v773 = vadd.f32 %v568, %v771
        %v774 = vadd.f32 %v569, %v772
        %775 = vst [vmem:[%s261] sm:$0xff] %v773
        %776 = vst [vmem:[%s261 + $0x8] sm:$0xff] %v774
        %s777 = sand.u32 %s148, 1
        %s778 = scalar_lea.sflag [#allocation3], %s777
        %s779 = sand.u32 %s148, 1
        %s780 = smul.addr %s779, 16
        %s781 = scalar_lea.vmem [#allocation2], %s780
        // Predicated region
        $region37: #{tpu_custom_call.1} parent=35 // pred_check
          %p782 = pneg %p158
        $region38: #{tpu_custom_call.1} parent=35 // pred_check_branch
          %784 = sbr.rel (%p782) target = $region40
        $region39: #{tpu_custom_call.1} parent=35 // pred_region
          %786 = vsyncadd %s778, 0
          %s787 = smul.addr %s22, 2
          %s788 = sadd.s32 %s23, %s787
          %s789 = smul.addr %s788, 8
          %s790 = scalar_lea.hbm %s4, %s789
          %s791 = sshll.u32 %s781, 4
          %s792 = int_to_ptr.vmem [resolvable:$true] %s791
          %s793 = sshll.u32 %s790, 4
          %s794 = int_to_ptr.hbm [resolvable:$true] %s793
          %799 = dma.vmem_to_hbm [thread:$0]  %s792, 256, %s794, %s778, 128, 128, 8
        $region40: #{tpu_custom_call.1} parent=35 // pred_fallthru
          _
      $region36: #{tpu_custom_call.1} parent=5 // pred_fallthru
        _
      %p800 = scmp.le.s32.totalorder 2, %s13
      // Predicated region
      $region41: #{tpu_custom_call.1} parent=5 // pred_check
        %p801 = pneg %p800
      $region42: #{tpu_custom_call.1} parent=5 // pred_check_branch
        %803 = sbr.rel (%p801) target = $region44
      $region43: #{tpu_custom_call.1} parent=5 // pred_region
        %s804 = ssub.s32 %s13, 2
        // Predicated region
        $region45: #{tpu_custom_call.1} parent=43 // pred_check
          %p805 = pneg %p164
        $region46: #{tpu_custom_call.1} parent=43 // pred_check_branch
          %807 = sbr.rel (%p805) target = $region48
        $region47: #{tpu_custom_call.1} parent=43 // pred_region
          %s808 = sand.u32 %s149, 1
          %s809 = scalar_lea.sflag [#allocation3], %s808
          %s810 = sand.u32 %s149, 1
          %s811 = smul.addr %s810, 16
          %s812 = scalar_lea.vmem [#allocation2], %s811
          %814 = dma.done %s809, 256
        $region48: #{tpu_custom_call.1} parent=43 // pred_fallthru
          _
      $region44: #{tpu_custom_call.1} parent=5 // pred_fallthru
        _
    $region6: #{tpu_custom_call.1} parent=1 // loop_footer
      %s17 = sadd.s32 1, %s13
    $region7: #{tpu_custom_call.1} parent=1 // loop_footer_branch
      %12 = sbr.rel target = $region3
    $region8: #{tpu_custom_call.1} parent=1 // loop_exit
      _
    %815 = vsyncpa [#allocation3], 1
    %s816 = scalar_lea.sflag [#allocation3], 1
    %817 = vsyncpa %s816, 1

</llo_original>
